<compile_context>
chip_gen: v7x
topology: tpu7x:2x2x1
jax: 0.10.0
libtpu: 0.0.40
codegen_flags: <defaults>
</compile_context>

<pallas_src>
import functools

import jax
import jax.numpy as jnp
from jax.experimental import pallas as pl
from jax.experimental.pallas import tpu as pltpu


def _ls_ce_kernel(
    logits_ref,   # (tile_n, C) input block
    target_ref,   # (tile_n, 1) int32 input block
    smooth_ref,   # (tile_n, 1) f32 output block: -sum_c log_preds per row
    nll_ref,      # (tile_n, 1) f32 output block: -log_preds[n, target[n]]
    *,
    n_rows,
    tile_n,
):
    step = pl.program_id(0)
    num_classes = logits_ref.shape[-1]

    x = logits_ref[...].astype(jnp.float32)                             # (tile_n, C)

    # Stable log-softmax statistics; log_preds is never materialized.
    m = jnp.max(x, axis=-1, keepdims=True)                              # (tile_n, 1)
    shifted = x - m                                                     # (tile_n, C)
    lse = jnp.log(jnp.sum(jnp.exp(shifted), axis=-1, keepdims=True))    # (tile_n, 1)
    row_sum_shifted = jnp.sum(shifted, axis=-1, keepdims=True)          # (tile_n, 1)

    # Gather shifted[n, target[n]] via a (1, C) lane-iota compare (no dynamic
    # gather on TPU); the compare broadcasts to the full tile, the iota itself
    # is a single row.
    cls_ids = jax.lax.broadcasted_iota(jnp.int32, (1, num_classes), 1)  # (1, C)
    tgt = target_ref[...]                                               # (tile_n, 1)
    picked = jnp.sum(
        jnp.where(cls_ids == tgt, shifted, 0.0), axis=-1, keepdims=True
    )                                                                   # (tile_n, 1)

    row_smooth = num_classes * lse - row_sum_shifted                    # -sum_c log_preds
    row_nll = lse - picked                                              # -log_preds[target]

    # Per-row masking of the (possibly padded) ragged last tile.  This is a
    # SELECT (not a multiply) so NaN/Inf garbage in padded rows is dropped.
    row_ids = step * tile_n + jax.lax.broadcasted_iota(jnp.int32, (tile_n, 1), 0)
    valid = row_ids < n_rows
    smooth_ref[...] = jnp.where(valid, row_smooth, 0.0)
    nll_ref[...] = jnp.where(valid, row_nll, 0.0)


def _pick_tile_n(n, c, itemsize):
    """Byte-budgeted row tile (no artificial row cap), dtype-aware alignment."""
    if itemsize >= 4:
        align = 8
    elif itemsize == 2:
        align = 16        # bf16 sublane packing
    else:
        align = 32        # int8 / fp8 sublane packing

    # Working set per row: double-buffered input block + ~4 full-tile f32
    # intermediates (cast x, shifted, exp(shifted), compare/select temp).
    per_row_bytes = 2 * c * itemsize + 4 * c * 4
    budget_bytes = 20 * 1024 * 1024            # safe under v7x's 64 MiB VMEM
    rows = (budget_bytes // max(1, per_row_bytes)) // align * align
    rows = max(align, rows)
    if rows >= n:
        return n                               # single full-array block (always legal)
    return rows


@functools.partial(jax.jit, static_argnames=("eps", "reduction", "tile_override"))
def label_smoothing_cross_entropy(output, target, eps=0.1, reduction="mean",
                                  tile_override=None):
    """Matches LabelSmoothingCrossEntropy.forward for 2-D `output` [N, C]."""
    if reduction not in ("mean", "sum", "none"):
        raise ValueError(f"unsupported reduction: {reduction!r}")

    n, c = output.shape
    target2d = target.astype(jnp.int32).reshape(n, 1)

    tile_n = tile_override if tile_override is not None else _pick_tile_n(
        n, c, output.dtype.itemsize)
    grid = (pl.cdiv(n, tile_n),)

    kernel = functools.partial(_ls_ce_kernel, n_rows=n, tile_n=tile_n)

    row_smooth, row_nll = pl.pallas_call(
        kernel,
        out_shape=(
            jax.ShapeDtypeStruct((n, 1), jnp.float32),
            jax.ShapeDtypeStruct((n, 1), jnp.float32),
        ),
        grid=grid,
        in_specs=[
            pl.BlockSpec((tile_n, c), lambda i: (i, 0)),
            pl.BlockSpec((tile_n, 1), lambda i: (i, 0)),
        ],
        out_specs=(
            pl.BlockSpec((tile_n, 1), lambda i: (i, 0)),
            pl.BlockSpec((tile_n, 1), lambda i: (i, 0)),
        ),
        compiler_params=pltpu.CompilerParams(
            dimension_semantics=("parallel",),       # no cross-step state -> megacore OK
            vmem_limit_bytes=32 * 1024 * 1024,
        ),
    )(output, target2d)

    row_smooth = row_smooth[:, 0]
    row_nll = row_nll[:, 0]

    if reduction == "sum":
        smooth = jnp.sum(row_smooth)
        nll = jnp.sum(row_nll)
    elif reduction == "mean":
        smooth = jnp.mean(row_smooth)
        nll = jnp.mean(row_nll)
    else:  # 'none'
        smooth = row_smooth
        nll = row_nll

    return smooth * eps / c + (1.0 - eps) * nll


def _ref_loss(logits, target, eps, reduction):
    log_preds = jax.nn.log_softmax(logits.astype(jnp.float32), axis=-1)
    c = logits.shape[-1]
    picked = jnp.take_along_axis(
        log_preds, target[:, None].astype(jnp.int32), axis=-1)[:, 0]
    if reduction == "sum":
        smooth = -log_preds.sum()
        nll = -picked.sum()
    elif reduction == "mean":
        smooth = (-log_preds.sum(axis=-1)).mean()
        nll = (-picked).mean()
    else:
        smooth = -log_preds.sum(axis=-1)
        nll = -picked
    return smooth * eps / c + (1.0 - eps) * nll


if __name__ == "__main__":
    key = jax.random.PRNGKey(0)
    k1, k2, k3, k4, k5, k6 = jax.random.split(key, 6)

    # Case 1: small batch, single full-array tile, 'mean' reduction.
    N1, C1 = 8, 32
    logits1 = jax.random.normal(k1, (N1, C1), dtype=jnp.float32)
    target1 = jax.random.randint(k2, (N1,), 0, C1, dtype=jnp.int32)
    loss1 = label_smoothing_cross_entropy(logits1, target1, eps=0.1, reduction="mean")
    jax.block_until_ready(loss1)
    ref1 = _ref_loss(logits1, target1, 0.1, "mean")
    assert jnp.allclose(loss1, ref1, rtol=1e-5, atol=1e-5), (loss1, ref1)

    # Case 2: forced small tile -> multi-tile parallel grid with a ragged last
    # tile (exercises padded-row masking + output clipping), 'sum' reduction.
    N2, C2 = 20, 32
    logits2 = jax.random.normal(k3, (N2, C2), dtype=jnp.float32)
    target2 = jax.random.randint(k4, (N2,), 0, C2, dtype=jnp.int32)
    loss2 = label_smoothing_cross_entropy(logits2, target2, eps=0.1, reduction="sum",
                                          tile_override=8)
    jax.block_until_ready(loss2)
    ref2 = _ref_loss(logits2, target2, 0.1, "sum")
    assert jnp.allclose(loss2, ref2, rtol=1e-5, atol=1e-4), (loss2, ref2)

    # Case 3: bf16 input, 16-aligned tile, ragged last tile, 'mean' reduction.
    N3, C3 = 24, 16
    logits3 = jax.random.normal(k5, (N3, C3), dtype=jnp.bfloat16)
    target3 = jax.random.randint(k6, (N3,), 0, C3, dtype=jnp.int32)
    loss3 = label_smoothing_cross_entropy(logits3, target3, eps=0.1, reduction="mean",
                                          tile_override=16)
    jax.block_until_ready(loss3)
    ref3 = _ref_loss(logits3, target3, 0.1, "mean")
    assert jnp.allclose(loss3, ref3, rtol=1e-4, atol=1e-4), (loss3, ref3)

    print("KERNEL_OK")
</pallas_src>

<mosaic_0001>
module attributes {stable_mosaic.version = 11 : i64} {
  func.func @_ls_ce_kernel(%arg0: i32, %arg1: memref<8x32xf32, #tpu.memory_space<vmem>>, %arg2: memref<8x1xi32, #tpu.memory_space<vmem>>, %arg3: memref<8x1xf32, #tpu.memory_space<vmem>>, %arg4: memref<8x1xf32, #tpu.memory_space<vmem>>) attributes {dimension_semantics = [#tpu.dimension_semantics<parallel>], iteration_bounds = array<i64: 1>, scalar_prefetch = 0 : i64, scratch_operands = 0 : i64, tpu.core_type = #tpu.core_type<tc>, window_params = [{transform_indices = @transform_0, window_bounds = array<i64: 8, 32>}, {transform_indices = @transform_1, window_bounds = array<i64: 8, 1>}, {transform_indices = @transform_2, window_bounds = array<i64: 8, 1>}, {transform_indices = @transform_3, window_bounds = array<i64: 8, 1>}]} {
    %c0 = arith.constant 0 : index
    %c0_0 = arith.constant 0 : index
    %0 = vector.load %arg1[%c0, %c0_0] : memref<8x32xf32, #tpu.memory_space<vmem>>, vector<8x32xf32>
    %cst = arith.constant dense<0xFF800000> : vector<8xf32>
    %1 = vector.multi_reduction <maximumf>, %0, %cst [1] : vector<8x32xf32> to vector<8xf32>
    %2 = vector.shape_cast %1 : vector<8xf32> to vector<8x1xf32>
    %3 = vector.broadcast %2 : vector<8x1xf32> to vector<8x32xf32>
    %4 = arith.subf %0, %3 : vector<8x32xf32>
    %5 = math.exp %4 : vector<8x32xf32>
    %cst_1 = arith.constant dense<0.000000e+00> : vector<8xf32>
    %6 = vector.multi_reduction <add>, %5, %cst_1 [1] : vector<8x32xf32> to vector<8xf32>
    %7 = vector.shape_cast %6 : vector<8xf32> to vector<8x1xf32>
    %8 = math.log %7 : vector<8x1xf32>
    %cst_2 = arith.constant dense<0.000000e+00> : vector<8xf32>
    %9 = vector.multi_reduction <add>, %4, %cst_2 [1] : vector<8x32xf32> to vector<8xf32>
    %10 = vector.shape_cast %9 : vector<8xf32> to vector<8x1xf32>
    %11 = tpu.iota {dimensions = array<i32: 1>} : vector<1x32xi32>
    %c0_3 = arith.constant 0 : index
    %c0_4 = arith.constant 0 : index
    %12 = vector.load %arg2[%c0_3, %c0_4] : memref<8x1xi32, #tpu.memory_space<vmem>>, vector<8x1xi32>
    %13 = vector.broadcast %11 : vector<1x32xi32> to vector<8x32xi32>
    %14 = vector.broadcast %12 : vector<8x1xi32> to vector<8x32xi32>
    %15 = arith.cmpi eq, %13, %14 : vector<8x32xi32>
    %cst_5 = arith.constant 0.000000e+00 : f32
    %16 = vector.broadcast %cst_5 : f32 to vector<8x32xf32>
    %17 = arith.select %15, %4, %16 : vector<8x32xi1>, vector<8x32xf32>
    %cst_6 = arith.constant dense<0.000000e+00> : vector<8xf32>
    %18 = vector.multi_reduction <add>, %17, %cst_6 [1] : vector<8x32xf32> to vector<8xf32>
    %19 = vector.shape_cast %18 : vector<8xf32> to vector<8x1xf32>
    %cst_7 = arith.constant 3.200000e+01 : f32
    %20 = vector.broadcast %cst_7 : f32 to vector<8x1xf32>
    %21 = arith.mulf %20, %8 : vector<8x1xf32>
    %22 = arith.subf %21, %10 : vector<8x1xf32>
    %23 = arith.subf %8, %19 : vector<8x1xf32>
    %c8_i32 = arith.constant 8 : i32
    %24 = arith.muli %arg0, %c8_i32 : i32
    %25 = tpu.iota {dimensions = array<i32: 0>} : vector<8x1xi32>
    %26 = vector.broadcast %24 : i32 to vector<8x1xi32>
    %27 = arith.addi %26, %25 : vector<8x1xi32>
    %c8_i32_8 = arith.constant 8 : i32
    %28 = vector.broadcast %c8_i32_8 : i32 to vector<8x1xi32>
    %29 = arith.cmpi slt, %27, %28 : vector<8x1xi32>
    %cst_9 = arith.constant 0.000000e+00 : f32
    %30 = vector.broadcast %cst_9 : f32 to vector<8x1xf32>
    %31 = arith.select %29, %22, %30 : vector<8x1xi1>, vector<8x1xf32>
    %c0_10 = arith.constant 0 : index
    %c0_11 = arith.constant 0 : index
    %32 = vector.load %arg3[%c0_10, %c0_11] : memref<8x1xf32, #tpu.memory_space<vmem>>, vector<8x1xf32>
    tpu.vector_store %arg3[%c0_10, %c0_11], %31 {strides = array<i32>} : memref<8x1xf32, #tpu.memory_space<vmem>>, vector<8x1xf32>,
    %cst_12 = arith.constant 0.000000e+00 : f32
    %33 = vector.broadcast %cst_12 : f32 to vector<8x1xf32>
    %34 = arith.select %29, %23, %33 : vector<8x1xi1>, vector<8x1xf32>
    %c0_13 = arith.constant 0 : index
    %c0_14 = arith.constant 0 : index
    %35 = vector.load %arg4[%c0_13, %c0_14] : memref<8x1xf32, #tpu.memory_space<vmem>>, vector<8x1xf32>
    tpu.vector_store %arg4[%c0_13, %c0_14], %34 {strides = array<i32>} : memref<8x1xf32, #tpu.memory_space<vmem>>, vector<8x1xf32>,
    return
  }
  func.func @transform_0(%arg0: i32) -> (i32, i32) {
    %c0_i32 = arith.constant 0 : i32
    %c0_i32_0 = arith.constant 0 : i32
    return %arg0, %c0_i32 : i32, i32
  }
  func.func @transform_1(%arg0: i32) -> (i32, i32) {
    %c0_i32 = arith.constant 0 : i32
    %c0_i32_0 = arith.constant 0 : i32
    return %arg0, %c0_i32 : i32, i32
  }
  func.func @transform_2(%arg0: i32) -> (i32, i32) {
    %c0_i32 = arith.constant 0 : i32
    %c0_i32_0 = arith.constant 0 : i32
    return %arg0, %c0_i32 : i32, i32
  }
  func.func @transform_3(%arg0: i32) -> (i32, i32) {
    %c0_i32 = arith.constant 0 : i32
    %c0_i32_0 = arith.constant 0 : i32
    return %arg0, %c0_i32 : i32, i32
  }
}

</mosaic_0001>

<llo_original>
// kernel: label_smoothing_cross_entropy.1
$region0: #{label_smoothing_cross_entropy.1}
  #allocation0 [shape = 'u32[]', space=smem, size = 0x4, offset = 0x4, fixed_abs, tag = 'smem constant byte address 0x4 - core index']
  #allocation1 [shape = 'u32[144,128]{1,0:T(1,128)}', space=vmem, size = 0x12000, scoped, tag = 'internal scratch']
  %s0 = inlined_call_operand.vmem [shape: f32[8,32], index: 0, kind: input, shape index: {}]
  %s1 = inlined_call_operand.vmem [shape: s32[8,1], index: 1, kind: input, shape index: {}]
  %s2 = inlined_call_operand.vmem [shape: f32[8,1], index: 2, kind: output, shape index: {0}]
  %s3 = inlined_call_operand.vmem [shape: f32[8,1], index: 3, kind: output, shape index: {1}]
  %4 = xla_tuple %s2, %s3
  %s5 = sld [smem:[#allocation0]]
  $region26: #{label_smoothing_cross_entropy.1} parent=0
    _
  %s7 = ssub.s32 1, %s5
  %s8 = scalar_select 0, %s7, %s5
  // Predicated region
  $region2: #{label_smoothing_cross_entropy.1} parent=0 // pred_check
    _
  $region3: #{label_smoothing_cross_entropy.1} parent=0 // pred_check_branch
    %10 = sbr.rel (0) target = $region5
  $region4: #{label_smoothing_cross_entropy.1} parent=0 // pred_region
    _
  $region5: #{label_smoothing_cross_entropy.1} parent=0 // pred_fallthru
    _
  // Predicated region
  $region6: #{label_smoothing_cross_entropy.1} parent=0 // pred_check
    _
  $region7: #{label_smoothing_cross_entropy.1} parent=0 // pred_check_branch
    %12 = sbr.rel (0) target = $region9
  $region8: #{label_smoothing_cross_entropy.1} parent=0 // pred_region
    _
  $region9: #{label_smoothing_cross_entropy.1} parent=0 // pred_fallthru
    _
  %v13 = vld [vmem:[%s0] sm:$0xff]
  %vm14 = vcmask 261120
  %v15 = vsel %vm14, %v13, -inf
  %16 = vmax.xlane.f32.xlu0 %v15
  %v17 = vpop.xlane.xlu0 %16
  %v18 = vsub.f32 %v13, %v17
  %v19 = vmul.f32 %v18, 1.442695
  %v20 = vpow.pop %v19
  %v21 = vsel %vm14, %v20, 0.0
  %22 = vadd.xlane.f32.xlu0 %v21
  %v23 = vpop.xlane.xlu0 %22
  %v24 = vlog2.pop %v23
  %v25 = vmul.f32 %v24, 0.6931472
  %v26 = vsel %vm14, %v18, 0.0
  %27 = vadd.xlane.f32.xlu0 %v26
  %v28 = vpop.xlane.xlu0 %27
  %v29 = vlaneseq
  %v30 = vand.u32 %v29, 127
  %v31 = vld [vmem:[%s1] sm:$0xff]
  %32 = vset.pattern.permute.xlu0 0
  %33 = vperm.xlu0 %32, %v31
  %v34 = vpop.permute.xlu0 %33
  %vm35 = vcmp.eq.s32.totalorder %v30, %v34
  %v36 = vsel %vm35, %v18, 0.0
  %v37 = vsel %vm14, %v36, 0.0
  %38 = vadd.xlane.f32.xlu0 %v37
  %v39 = vpop.xlane.xlu0 %38
  %v40 = vmul.f32 %v25, 32.0
  %v41 = vsub.f32 %v40, %v28
  %v42 = vsub.f32 %v25, %v39
  %s43 = smul.u32 0, 8
  %v44 = vlaneseq
  %v45 = vshrl.u32 %v44, 7
  %v46 = vstv %s43
  %v47 = vadd.s32 %v46, %v45
  %vm48 = vcmp.lt.s32.totalorder %v47, 8
  %v49 = vsel %vm48, %v41, 0.0
  %vm50 = vcmask 7168
  %51 = vst.msk [vmem:[%s2] sm:$0xff] %vm50, %v49
  %v52 = vsel %vm48, %v42, 0.0
  %53 = vst.msk [vmem:[%s3] sm:$0xff] %vm50, %v52
  // Predicated region
  $region10: #{label_smoothing_cross_entropy.1} parent=0 // pred_check
    _
  $region11: #{label_smoothing_cross_entropy.1} parent=0 // pred_check_branch
    %55 = sbr.rel (0) target = $region13
  $region12: #{label_smoothing_cross_entropy.1} parent=0 // pred_region
    _
  $region13: #{label_smoothing_cross_entropy.1} parent=0 // pred_fallthru
    _
  // Predicated region
  $region14: #{label_smoothing_cross_entropy.1} parent=0 // pred_check
    _
  $region15: #{label_smoothing_cross_entropy.1} parent=0 // pred_check_branch
    %57 = sbr.rel (0) target = $region17
  $region16: #{label_smoothing_cross_entropy.1} parent=0 // pred_region
    _
  $region17: #{label_smoothing_cross_entropy.1} parent=0 // pred_fallthru
    _
  // Predicated region
  $region18: #{label_smoothing_cross_entropy.1} parent=0 // pred_check
    _
  $region19: #{label_smoothing_cross_entropy.1} parent=0 // pred_check_branch
    %59 = sbr.rel (0) target = $region21
  $region20: #{label_smoothing_cross_entropy.1} parent=0 // pred_region
    _
  $region21: #{label_smoothing_cross_entropy.1} parent=0 // pred_fallthru
    _
  // Predicated region
  $region22: #{label_smoothing_cross_entropy.1} parent=0 // pred_check
    _
  $region23: #{label_smoothing_cross_entropy.1} parent=0 // pred_check_branch
    %61 = sbr.rel (0) target = $region25
  $region24: #{label_smoothing_cross_entropy.1} parent=0 // pred_region
    _
  $region25: #{label_smoothing_cross_entropy.1} parent=0 // pred_fallthru
    _

</llo_original>
